<compile_context>
chip_gen: v7x
topology: tpu7x:2x2x1
jax: 0.10.0
libtpu: 0.0.40
codegen_flags: <defaults>
</compile_context>

<pallas_src>
import functools
import math

import jax
import jax.numpy as jnp
from jax import lax
from jax.experimental import pallas as pl
from jax.experimental.pallas import tpu as pltpu

EPS = 1e-6


def _round_up(n, m):
    return ((n + m - 1) // m) * m


def _cdiv(a, b):
    return -(-a // b)


def _tpu_vmem_and_cores():
    """Best-effort (VMEM bytes, TensorCores-per-chip) query with safe fallbacks."""
    kind = ""
    try:
        kind = jax.devices()[0].device_kind.lower()
    except Exception:
        pass
    vmem = None
    try:
        info = pltpu.get_tpu_info()
        vmem = int(getattr(info, "vmem_capacity_bytes", 0)) or None
    except Exception:
        vmem = None
    if vmem is None:
        if "v7" in kind:
            vmem = 64 << 20
        elif any(v in kind for v in ("v5", "v6")):
            vmem = 128 << 20
        else:
            vmem = 64 << 20          # conservative default
    cores = 2 if "v7" in kind else 1
    return vmem, cores


def _pad_cast(a, shape, dtype):
    """Pad with zeros to `shape` and cast; skip the copy when already aligned."""
    a = a.astype(dtype)
    if tuple(a.shape) == tuple(shape):
        return a
    out = jnp.zeros(shape, dtype)
    return out.at[tuple(slice(0, s) for s in a.shape)].set(a)


def prepare_mlp_params(gamma, w1, b1, w2, b2):
    """One-time weight prep (pad to lane-dense sizes, cast MXU operands to bf16).

    w1: (D, H), w2: (H, D) -- i.e. the TRANSPOSE of PyTorch's fc{1,2}.weight.
    Call once at module init; the result is reused by every mlp_block call.
    """
    D, H = w1.shape
    Dp = _round_up(D, 128)
    Hcols = _round_up(H, 128)

    vmem_cap, _ = _tpu_vmem_and_cores()
    th_target = 1024 if vmem_cap >= (96 << 20) else 512
    n_k = max(1, _cdiv(Hcols, th_target))
    th = _round_up(_cdiv(Hcols, n_k), 128)   # balanced hidden blocks, lane-dense
    Hp = n_k * th

    return dict(
        g=_pad_cast(gamma.reshape(1, D), (1, Dp), jnp.float32),
        w1=_pad_cast(w1, (Dp, Hp), jnp.bfloat16),
        b1=_pad_cast(b1.reshape(1, H), (1, Hp), jnp.float32),
        w2=_pad_cast(w2, (Hp, Dp), jnp.bfloat16),
        b2=_pad_cast(b2.reshape(1, D), (1, Dp), jnp.float32),
        th=int(th),
        d_true=int(D),
    )


def _choose_tiles(T, Dp, Hp, th, x_sz, out_sz, acc_in_out, budget, num_tc):
    """Pick (tm, n_token_tiles, th) so the double-buffered footprint fits VMEM."""
    sub = 8 if (x_sz >= 4 and out_sz >= 4) else 16
    T8 = _round_up(max(T, 1), sub)
    tm_target = 1024 if budget >= (80 << 20) else 512

    def tm_for(n):
        return _round_up(_cdiv(T8, n), sub)

    def est(tm_, th_):
        # 2x = double-buffered pipeline stages.
        per_tok = tm_ * Dp * (2 * x_sz + 2 * out_sz + 2 + (0 if acc_in_out else 4))
        weights = 2 * 2 * Dp * th_ * 2      # w1 + w2 blocks, bf16
        small = 6 * Dp * 4 + Hp * 4         # gamma, b2, resident b1
        return per_tok + weights + small

    n_tiles = max(1, _cdiv(T8, tm_target))
    if num_tc >= 2 and n_tiles == 1 and T8 >= 2 * sub:
        n_tiles = 2                         # keep both v7x TensorCores busy
    tm = tm_for(n_tiles)

    # Over budget: shrink th first (hurts only per-step overhead), then tm
    # (hurts weight reuse -> HBM traffic), per the review's priority.
    while est(tm, th) > budget and th > 128:
        cand = th // 2
        th = cand if (cand % 128 == 0 and Hp % cand == 0) else 128
    while est(tm, th) > budget and tm > sub:
        n_tiles += 1
        tm = tm_for(n_tiles)
    return tm, n_tiles, th


def _mlp_block_kernel(x_ref, g_ref, w1_ref, b1_ref, w2_ref, b2_ref, o_ref,
                      xn_ref, *acc_scratch, d_true, acc_in_out):
    # Grid: (token tiles ["parallel"], hidden blocks ["arbitrary" reduction]).
    k = pl.program_id(1)
    acc_ref = o_ref if acc_in_out else acc_scratch[0]

    # --- once per token tile: RMSNorm, cache bf16 normalized tile, zero acc ---
    @pl.when(k == 0)
    def _():
        x = x_ref[...].astype(jnp.float32)
        # Padded D columns are zero, so sum(x^2) equals the un-padded sum;
        # divide by the true embedding dim, not the padded one.
        ss = jnp.sum(x * x, axis=-1, keepdims=True)
        inv = lax.rsqrt(ss * (1.0 / d_true) + EPS)
        xn_ref[...] = (g_ref[...] * x * inv).astype(jnp.bfloat16)
        acc_ref[...] = jnp.zeros_like(acc_ref)

    # --- per hidden block: fc1 + exact GELU + partial fc2 (f32 accumulation) ---
    b1 = b1_ref[pl.ds(k, 1), :]            # resident bias, sublane-sliced per block
    h = jnp.dot(xn_ref[...], w1_ref[...],
                preferred_element_type=jnp.float32) + b1
    # exact (erf) GELU, matching nn.GELU() default; elementwise math kept in f32
    h = 0.5 * h * (1.0 + lax.erf(h * (1.0 / math.sqrt(2.0))))
    # dropout (inference) -> identity.  TODO(synk): training-mode dropout mask.
    acc_ref[...] += jnp.dot(h.astype(jnp.bfloat16), w2_ref[...],
                            preferred_element_type=jnp.float32)

    # --- last hidden block: add fc2 bias, emit output in the caller's dtype ---
    @pl.when(k == pl.num_programs(1) - 1)
    def _():
        o_ref[...] = (acc_ref[...] + b2_ref[...]).astype(o_ref.dtype)


def mlp_block(x, params):
    """Apply the fused MLP block.  x: (..., D); params from prepare_mlp_params."""
    orig_shape = x.shape
    orig_dtype = x.dtype
    D = params["d_true"]
    Dp = params["g"].shape[1]
    Hp = params["w1"].shape[1]
    th = params["th"]

    xt = x.reshape(-1, D)
    T = xt.shape[0]

    vmem_cap, num_tc = _tpu_vmem_and_cores()
    vmem_limit = int(min(vmem_cap - (8 << 20), vmem_cap * 0.85))
    tile_budget = max(16 << 20, vmem_limit - (4 << 20))

    x_sz = jnp.dtype(orig_dtype).itemsize
    out_sz = x_sz
    acc_in_out = (jnp.dtype(orig_dtype) == jnp.dtype(jnp.float32))

    tm, n_tiles, th = _choose_tiles(T, Dp, Hp, th, x_sz, out_sz,
                                    acc_in_out, tile_budget, num_tc)
    Tp = n_tiles * tm
    n_k = Hp // th

    # Pad x in its ORIGINAL dtype only when needed (zero padding is inert:
    # padded D cols of x/gamma/w1 are zero, padded H cols give GELU(0)=0 into
    # zero rows of w2, padded token rows are sliced off below).
    if (Tp, Dp) != xt.shape:
        xt_p = jnp.zeros((Tp, Dp), orig_dtype).at[:T, :D].set(xt)
    else:
        xt_p = xt
    b1_blocked = params["b1"].reshape(n_k, th)

    scratch_shapes = [pltpu.VMEM((tm, Dp), jnp.bfloat16)]   # cached RMSNorm tile
    if not acc_in_out:
        scratch_shapes.append(pltpu.VMEM((tm, Dp), jnp.float32))  # fc2 accumulator

    kernel = functools.partial(_mlp_block_kernel,
                               d_true=float(D), acc_in_out=acc_in_out)

    out = pl.pallas_call(
        kernel,
        out_shape=jax.ShapeDtypeStruct((Tp, Dp), orig_dtype),
        grid_spec=pltpu.PrefetchScalarGridSpec(
            num_scalar_prefetch=0,
            grid=(n_tiles, n_k),
            in_specs=[
                pl.BlockSpec((tm, Dp), lambda i, k: (i, 0)),    # x token tile (resident over k)
                pl.BlockSpec((1, Dp), lambda i, k: (0, 0)),     # rms gamma (tiny, constant)
                pl.BlockSpec((Dp, th), lambda i, k: (0, k)),    # w1 hidden block (bf16)
                pl.BlockSpec((n_k, th), lambda i, k: (0, 0)),   # b1 (resident, sliced in-kernel)
                pl.BlockSpec((th, Dp), lambda i, k: (k, 0)),    # w2 hidden block (bf16)
                pl.BlockSpec((1, Dp), lambda i, k: (0, 0)),     # b2 (tiny, constant)
            ],
            out_specs=pl.BlockSpec((tm, Dp), lambda i, k: (i, 0)),
            scratch_shapes=scratch_shapes,
        ),
        compiler_params=pltpu.CompilerParams(
            dimension_semantics=("parallel", "arbitrary"),
            vmem_limit_bytes=vmem_limit,
        ),
    )(xt_p, params["g"], params["w1"], b1_blocked, params["w2"], params["b2"])

    return out[:T, :D].reshape(orig_shape)


def _reference(x, gamma, w1, b1, w2, b2):
    xf = x.astype(jnp.float32)
    xn = gamma * xf * lax.rsqrt(jnp.mean(xf * xf, axis=-1, keepdims=True) + EPS)
    h = xn @ w1 + b1
    h = 0.5 * h * (1.0 + lax.erf(h / jnp.sqrt(2.0)))
    return h @ w2 + b2


if __name__ == "__main__":
    # Small shapes consistent with the module: (batch, seq, embedding_dim)
    batch, seq, embedding_dim, mlp_size = 2, 8, 32, 64

    key = jax.random.PRNGKey(0)
    kx, k1, k2, kb1, kb2 = jax.random.split(key, 5)

    x = jax.random.normal(kx, (batch, seq, embedding_dim), dtype=jnp.float32)

    # Deterministic parameter init (PyTorch-ish uniform fan-in scaling).
    gamma = jnp.ones((embedding_dim,), dtype=jnp.float32)  # RMSNorm weight
    lim1 = 1.0 / math.sqrt(embedding_dim)
    lim2 = 1.0 / math.sqrt(mlp_size)
    # fc1.weight in PyTorch is (mlp_size, embedding_dim); we store its transpose.
    w1 = jax.random.uniform(k1, (embedding_dim, mlp_size), jnp.float32, -lim1, lim1)
    b1 = jax.random.uniform(kb1, (mlp_size,), jnp.float32, -lim1, lim1)
    w2 = jax.random.uniform(k2, (mlp_size, embedding_dim), jnp.float32, -lim2, lim2)
    b2 = jax.random.uniform(kb2, (embedding_dim,), jnp.float32, -lim2, lim2)

    # One-time weight prep (hoisted out of the call path).
    params = prepare_mlp_params(gamma, w1, b1, w2, b2)

    # f32 path (accumulates directly into the resident output block).
    y = jax.block_until_ready(mlp_block(x, params))
    y_ref = _reference(x, gamma, w1, b1, w2, b2)
    assert y.shape == x.shape and y.dtype == x.dtype
    # bf16 matmul operands (f32 accumulation) -> loosened tolerance vs f32 reference.
    assert jnp.allclose(y, y_ref, atol=5e-2, rtol=5e-2), "f32 mismatch vs reference"

    # bf16 path (exercises the f32 accumulator scratch + bf16 I/O).
    x_bf16 = x.astype(jnp.bfloat16)
    y_bf = jax.block_until_ready(mlp_block(x_bf16, params))
    y_bf_ref = _reference(x_bf16.astype(jnp.float32), gamma, w1, b1, w2, b2)
    assert y_bf.shape == x.shape and y_bf.dtype == jnp.bfloat16
    assert jnp.allclose(y_bf.astype(jnp.float32), y_bf_ref, atol=1e-1, rtol=1e-1), \
        "bf16 mismatch vs reference"

    print("KERNEL_OK")
</pallas_src>

<mosaic_0001>
module attributes {stable_mosaic.version = 11 : i64} {
  func.func @_mlp_block_kernel(%arg0: i32, %arg1: i32, %arg2: memref<16x128xf32, #tpu.memory_space<vmem>>, %arg3: memref<1x128xf32, #tpu.memory_space<vmem>>, %arg4: memref<128x128xbf16, #tpu.memory_space<vmem>>, %arg5: memref<1x128xf32, #tpu.memory_space<vmem>>, %arg6: memref<128x128xbf16, #tpu.memory_space<vmem>>, %arg7: memref<1x128xf32, #tpu.memory_space<vmem>>, %arg8: memref<16x128xf32, #tpu.memory_space<vmem>>, %arg9: memref<16x128xbf16, #tpu.memory_space<vmem>>) attributes {dimension_semantics = [#tpu.dimension_semantics<parallel>, #tpu.dimension_semantics<arbitrary>], iteration_bounds = array<i64: 1, 1>, scalar_prefetch = 0 : i64, scratch_operands = 1 : i64, tpu.core_type = #tpu.core_type<tc>, window_params = [{transform_indices = @transform_0, window_bounds = array<i64: 16, 128>}, {pipeline_mode = #tpu.pipeline_mode<synchronous>, transform_indices = @transform_1, window_bounds = array<i64: 1, 128>}, {transform_indices = @transform_2, window_bounds = array<i64: 128, 128>}, {pipeline_mode = #tpu.pipeline_mode<synchronous>, transform_indices = @transform_3, window_bounds = array<i64: 1, 128>}, {transform_indices = @transform_4, window_bounds = array<i64: 128, 128>}, {pipeline_mode = #tpu.pipeline_mode<synchronous>, transform_indices = @transform_5, window_bounds = array<i64: 1, 128>}, {transform_indices = @transform_6, window_bounds = array<i64: 16, 128>}]} {
    %c0_i32 = arith.constant 0 : i32
    %0 = arith.cmpi eq, %arg1, %c0_i32 : i32
    %1 = arith.extui %0 : i1 to i32
    %c0_i32_0 = arith.constant 0 : i32
    %2 = arith.cmpi ne, %1, %c0_i32_0 : i32
    scf.if %2 {
      %c0_17 = arith.constant 0 : index
      %c0_18 = arith.constant 0 : index
      %27 = vector.load %arg2[%c0_17, %c0_18] : memref<16x128xf32, #tpu.memory_space<vmem>>, vector<16x128xf32>
      %28 = arith.mulf %27, %27 : vector<16x128xf32>
      %cst_19 = arith.constant dense<0.000000e+00> : vector<16xf32>
      %29 = vector.multi_reduction <add>, %28, %cst_19 [1] : vector<16x128xf32> to vector<16xf32>
      %30 = vector.shape_cast %29 : vector<16xf32> to vector<16x1xf32>
      %cst_20 = arith.constant 3.125000e-02 : f32
      %31 = vector.broadcast %cst_20 : f32 to vector<16x1xf32>
      %32 = arith.mulf %30, %31 : vector<16x1xf32>
      %cst_21 = arith.constant 9.99999997E-7 : f32
      %33 = vector.broadcast %cst_21 : f32 to vector<16x1xf32>
      %34 = arith.addf %32, %33 : vector<16x1xf32>
      %35 = math.rsqrt %34 : vector<16x1xf32>
      %c0_22 = arith.constant 0 : index
      %c0_23 = arith.constant 0 : index
      %36 = vector.load %arg3[%c0_22, %c0_23] : memref<1x128xf32, #tpu.memory_space<vmem>>, vector<1x128xf32>
      %37 = vector.broadcast %36 : vector<1x128xf32> to vector<16x128xf32>
      %38 = arith.mulf %37, %27 : vector<16x128xf32>
      %39 = vector.broadcast %35 : vector<16x1xf32> to vector<16x128xf32>
      %40 = arith.mulf %38, %39 : vector<16x128xf32>
      %41 = arith.truncf %40 : vector<16x128xf32> to vector<16x128xbf16>
      %c0_24 = arith.constant 0 : index
      %c0_25 = arith.constant 0 : index
      %42 = vector.load %arg9[%c0_24, %c0_25] : memref<16x128xbf16, #tpu.memory_space<vmem>>, vector<16x128xbf16>
      tpu.vector_store %arg9[%c0_24, %c0_25], %41 {strides = array<i32>} : memref<16x128xbf16, #tpu.memory_space<vmem>>, vector<16x128xbf16>,
      %cst_26 = arith.constant 0.000000e+00 : f32
      %43 = vector.broadcast %cst_26 : f32 to vector<16x128xf32>
      %c0_27 = arith.constant 0 : index
      %c0_28 = arith.constant 0 : index
      %44 = vector.load %arg8[%c0_27, %c0_28] : memref<16x128xf32, #tpu.memory_space<vmem>>, vector<16x128xf32>
      tpu.vector_store %arg8[%c0_27, %c0_28], %43 {strides = array<i32>} : memref<16x128xf32, #tpu.memory_space<vmem>>, vector<16x128xf32>,
    } else {
    }
    %3 = arith.index_cast %arg1 : i32 to index
    %c0 = arith.constant 0 : index
    %4 = vector.load %arg5[%3, %c0] : memref<1x128xf32, #tpu.memory_space<vmem>>, vector<1x128xf32>
    %c0_1 = arith.constant 0 : index
    %c0_2 = arith.constant 0 : index
    %5 = vector.load %arg9[%c0_1, %c0_2] : memref<16x128xbf16, #tpu.memory_space<vmem>>, vector<16x128xbf16>
    %c0_3 = arith.constant 0 : index
    %c0_4 = arith.constant 0 : index
    %6 = vector.load %arg4[%c0_3, %c0_4] : memref<128x128xbf16, #tpu.memory_space<vmem>>, vector<128x128xbf16>
    %cst = arith.constant dense<0.000000e+00> : vector<16x128xf32>
    %7 = tpu.matmul %5, %6, %cst {dimension_numbers = #tpu.dot_dimension_numbers<[1], [0], [0], [1], [0, 0, 1, 1], [], []>} : vector<16x128xbf16>, vector<128x128xbf16>, vector<16x128xf32> -> vector<16x128xf32>
    %8 = vector.broadcast %4 : vector<1x128xf32> to vector<16x128xf32>
    %9 = arith.addf %7, %8 : vector<16x128xf32>
    %cst_5 = arith.constant 5.000000e-01 : f32
    %10 = vector.broadcast %cst_5 : f32 to vector<16x128xf32>
    %11 = arith.mulf %10, %9 : vector<16x128xf32>
    %cst_6 = arith.constant 0.707106769 : f32
    %12 = vector.broadcast %cst_6 : f32 to vector<16x128xf32>
    %13 = arith.mulf %9, %12 : vector<16x128xf32>
    %14 = math.erf %13 : vector<16x128xf32>
    %cst_7 = arith.constant 1.000000e+00 : f32
    %15 = vector.broadcast %cst_7 : f32 to vector<16x128xf32>
    %16 = arith.addf %15, %14 : vector<16x128xf32>
    %17 = arith.mulf %11, %16 : vector<16x128xf32>
    %c0_8 = arith.constant 0 : index
    %c0_9 = arith.constant 0 : index
    %18 = vector.load %arg8[%c0_8, %c0_9] : memref<16x128xf32, #tpu.memory_space<vmem>>, vector<16x128xf32>
    %19 = arith.truncf %17 : vector<16x128xf32> to vector<16x128xbf16>
    %c0_10 = arith.constant 0 : index
    %c0_11 = arith.constant 0 : index
    %20 = vector.load %arg6[%c0_10, %c0_11] : memref<128x128xbf16, #tpu.memory_space<vmem>>, vector<128x128xbf16>
    %cst_12 = arith.constant dense<0.000000e+00> : vector<16x128xf32>
    %21 = tpu.matmul %19, %20, %cst_12 {dimension_numbers = #tpu.dot_dimension_numbers<[1], [0], [0], [1], [0, 0, 1, 1], [], []>} : vector<16x128xbf16>, vector<128x128xbf16>, vector<16x128xf32> -> vector<16x128xf32>
    %22 = arith.addf %18, %21 : vector<16x128xf32>
    %c0_13 = arith.constant 0 : index
    %c0_14 = arith.constant 0 : index
    %23 = vector.load %arg8[%c0_13, %c0_14] : memref<16x128xf32, #tpu.memory_space<vmem>>, vector<16x128xf32>
    tpu.vector_store %arg8[%c0_13, %c0_14], %22 {strides = array<i32>} : memref<16x128xf32, #tpu.memory_space<vmem>>, vector<16x128xf32>,
    %c0_i32_15 = arith.constant 0 : i32
    %24 = arith.cmpi eq, %arg1, %c0_i32_15 : i32
    %25 = arith.extui %24 : i1 to i32
    %c0_i32_16 = arith.constant 0 : i32
    %26 = arith.cmpi ne, %25, %c0_i32_16 : i32
    scf.if %26 {
      %c0_17 = arith.constant 0 : index
      %c0_18 = arith.constant 0 : index
      %27 = vector.load %arg8[%c0_17, %c0_18] : memref<16x128xf32, #tpu.memory_space<vmem>>, vector<16x128xf32>
      %c0_19 = arith.constant 0 : index
      %c0_20 = arith.constant 0 : index
      %28 = vector.load %arg7[%c0_19, %c0_20] : memref<1x128xf32, #tpu.memory_space<vmem>>, vector<1x128xf32>
      %29 = vector.broadcast %28 : vector<1x128xf32> to vector<16x128xf32>
      %30 = arith.addf %27, %29 : vector<16x128xf32>
      %c0_21 = arith.constant 0 : index
      %c0_22 = arith.constant 0 : index
      %31 = vector.load %arg8[%c0_21, %c0_22] : memref<16x128xf32, #tpu.memory_space<vmem>>, vector<16x128xf32>
      tpu.vector_store %arg8[%c0_21, %c0_22], %30 {strides = array<i32>} : memref<16x128xf32, #tpu.memory_space<vmem>>, vector<16x128xf32>,
    } else {
    }
    return
  }
  func.func @transform_0(%arg0: i32, %arg1: i32) -> (i32, i32) {
    %c0_i32 = arith.constant 0 : i32
    %c0_i32_0 = arith.constant 0 : i32
    return %arg0, %c0_i32 : i32, i32
  }
  func.func @transform_1(%arg0: i32, %arg1: i32) -> (i32, i32) {
    %c0_i32 = arith.constant 0 : i32
    %c0_i32_0 = arith.constant 0 : i32
    %c0_i32_1 = arith.constant 0 : i32
    return %c0_i32, %c0_i32_0 : i32, i32
  }
  func.func @transform_2(%arg0: i32, %arg1: i32) -> (i32, i32) {
    %c0_i32 = arith.constant 0 : i32
    %c0_i32_0 = arith.constant 0 : i32
    return %c0_i32, %arg1 : i32, i32
  }
  func.func @transform_3(%arg0: i32, %arg1: i32) -> (i32, i32) {
    %c0_i32 = arith.constant 0 : i32
    %c0_i32_0 = arith.constant 0 : i32
    %c0_i32_1 = arith.constant 0 : i32
    return %c0_i32, %c0_i32_0 : i32, i32
  }
  func.func @transform_4(%arg0: i32, %arg1: i32) -> (i32, i32) {
    %c0_i32 = arith.constant 0 : i32
    %c0_i32_0 = arith.constant 0 : i32
    return %arg1, %c0_i32 : i32, i32
  }
  func.func @transform_5(%arg0: i32, %arg1: i32) -> (i32, i32) {
    %c0_i32 = arith.constant 0 : i32
    %c0_i32_0 = arith.constant 0 : i32
    %c0_i32_1 = arith.constant 0 : i32
    return %c0_i32, %c0_i32_0 : i32, i32
  }
  func.func @transform_6(%arg0: i32, %arg1: i32) -> (i32, i32) {
    %c0_i32 = arith.constant 0 : i32
    %c0_i32_0 = arith.constant 0 : i32
    return %arg0, %c0_i32 : i32, i32
  }
}

</mosaic_0001>

<llo_original>
// kernel: tpu_custom_call.1
$region0: #{tpu_custom_call.1}
  #allocation0 [shape = 'u32[]', space=smem, size = 0x4, offset = 0x4, fixed_abs, tag = 'smem constant byte address 0x4 - core index']
  #allocation1 [shape = 'u32[144,128]{1,0:T(1,128)}', space=vmem, size = 0x12000, scoped, tag = 'internal scratch']
  #allocation2 [shape = 'bf16[16,128]{1,0:T(16,128)(2,1)}', space=vmem, size = 0x1000, scoped, tag = 'scratch operand']
  %s0 = inlined_call_operand.hbm [shape: f32[16,128], index: 0, kind: input, shape index: {}]
  %s1 = inlined_call_operand.vmem [shape: f32[1,128], index: 1, kind: input, shape index: {}]
  %s2 = inlined_call_operand.hbm [shape: bf16[128,128], index: 2, kind: input, shape index: {}]
  %s3 = inlined_call_operand.vmem [shape: f32[1,128], index: 3, kind: input, shape index: {}]
  %s4 = inlined_call_operand.hbm [shape: bf16[128,128], index: 4, kind: input, shape index: {}]
  %s5 = inlined_call_operand.vmem [shape: f32[1,128], index: 5, kind: input, shape index: {}]
  %s6 = inlined_call_operand.hbm [shape: f32[16,128], index: 6, kind: output, shape index: {}]
  %s7 = sld [smem:[#allocation0]]
  $region54: #{tpu_custom_call.1} parent=0
    _
  %s9 = ssub.s32 1, %s7
  %s10 = scalar_select 0, %s9, %s7
  $region1: #{tpu_custom_call.1} parent=0
    #allocation3 [shape = 'u8[8192]{0}', space=vmem, size = 0x2000, scoped, tag = 'input window, operand 0, single buffered']
    #allocation4 [shape = 's32[1]{0}', space=sflag, size = 0x4, scoped, tag = 'scoped memory for tpu_custom_call.1']
    #allocation5 [shape = 's32[1]{0}', space=sflag, size = 0x4, scoped, tag = 'scoped memory for tpu_custom_call.1']
    #allocation6 [shape = 'u8[32768]{0}', space=vmem, size = 0x8000, scoped, tag = 'input window, operand 2, single buffered']
    #allocation7 [shape = 's32[1]{0}', space=sflag, size = 0x4, scoped, tag = 'scoped memory for tpu_custom_call.1']
    #allocation8 [shape = 'u8[32768]{0}', space=vmem, size = 0x8000, scoped, tag = 'input window, operand 4, single buffered']
    #allocation9 [shape = 'u8[8192]{0}', space=vmem, size = 0x2000, scoped, tag = 'output window, operand 0, single buffered']
    %11 = vsyncpa [#allocation4], 0
    %12 = vsyncpa [#allocation7], 0
    %13 = vsyncpa [#allocation5], 0
    // Predicated region
    $region2: #{tpu_custom_call.1} parent=1 // pred_check
      _
    $region3: #{tpu_custom_call.1} parent=1 // pred_check_branch
      %15 = sbr.rel (0) target = $region5
    $region4: #{tpu_custom_call.1} parent=1 // pred_region
      %s17 = ssub.s32 256, 256
      %18 = vsyncadd [#allocation4], %s17
      %s19 = sshll.u32 [#allocation3], 4
      %s20 = int_to_ptr.vmem [resolvable:$true] %s19
      %25 = dma.hbm_to_vmem [thread:$0]  %s0, 256, %s20, [#allocation4], 128, 128, 8
    $region5: #{tpu_custom_call.1} parent=1 // pred_fallthru
      _
    // Predicated region
    $region6: #{tpu_custom_call.1} parent=1 // pred_check
      _
    $region7: #{tpu_custom_call.1} parent=1 // pred_check_branch
      %27 = sbr.rel (0) target = $region9
    $region8: #{tpu_custom_call.1} parent=1 // pred_region
      _
    $region9: #{tpu_custom_call.1} parent=1 // pred_fallthru
      _
    // Predicated region
    $region10: #{tpu_custom_call.1} parent=1 // pred_check
      _
    $region11: #{tpu_custom_call.1} parent=1 // pred_check_branch
      %29 = sbr.rel (0) target = $region13
    $region12: #{tpu_custom_call.1} parent=1 // pred_region
      %s31 = ssub.s32 1024, 1024
      %32 = vsyncadd [#allocation7], %s31
      %s33 = sshll.u32 [#allocation6], 4
      %s34 = int_to_ptr.vmem [resolvable:$true] %s33
      %39 = dma.hbm_to_vmem [thread:$0]  %s2, 1024, %s34, [#allocation7], 64, 64, 4
    $region13: #{tpu_custom_call.1} parent=1 // pred_fallthru
      _
    // Predicated region
    $region14: #{tpu_custom_call.1} parent=1 // pred_check
      _
    $region15: #{tpu_custom_call.1} parent=1 // pred_check_branch
      %41 = sbr.rel (0) target = $region17
    $region16: #{tpu_custom_call.1} parent=1 // pred_region
      _
    $region17: #{tpu_custom_call.1} parent=1 // pred_fallthru
      _
    // Predicated region
    $region18: #{tpu_custom_call.1} parent=1 // pred_check
      _
    $region19: #{tpu_custom_call.1} parent=1 // pred_check_branch
      %43 = sbr.rel (0) target = $region21
    $region20: #{tpu_custom_call.1} parent=1 // pred_region
      %s45 = ssub.s32 1024, 1024
      %46 = vsyncadd [#allocation7], %s45
      %s47 = sshll.u32 [#allocation8], 4
      %s48 = int_to_ptr.vmem [resolvable:$true] %s47
      %53 = dma.hbm_to_vmem [thread:$0]  %s4, 1024, %s48, [#allocation7], 64, 64, 4
    $region21: #{tpu_custom_call.1} parent=1 // pred_fallthru
      _
    // Predicated region
    $region22: #{tpu_custom_call.1} parent=1 // pred_check
      _
    $region23: #{tpu_custom_call.1} parent=1 // pred_check_branch
      %55 = sbr.rel (0) target = $region25
    $region24: #{tpu_custom_call.1} parent=1 // pred_region
      _
    $region25: #{tpu_custom_call.1} parent=1 // pred_fallthru
      _
    // Predicated region
    $region26: #{tpu_custom_call.1} parent=1 // pred_check
      _
    $region27: #{tpu_custom_call.1} parent=1 // pred_check_branch
      %57 = sbr.rel (0) target = $region29
    $region28: #{tpu_custom_call.1} parent=1 // pred_region
      %58 = dma.done [#allocation4], 256
    $region29: #{tpu_custom_call.1} parent=1 // pred_fallthru
      _
    // Predicated region
    $region30: #{tpu_custom_call.1} parent=1 // pred_check
      _
    $region31: #{tpu_custom_call.1} parent=1 // pred_check_branch
      %60 = sbr.rel (0) target = $region33
    $region32: #{tpu_custom_call.1} parent=1 // pred_region
      %61 = dma.done [#allocation7], 1024
    $region33: #{tpu_custom_call.1} parent=1 // pred_fallthru
      _
    // Predicated region
    $region34: #{tpu_custom_call.1} parent=1 // pred_check
      _
    $region35: #{tpu_custom_call.1} parent=1 // pred_check_branch
      %63 = sbr.rel (0) target = $region37
    $region36: #{tpu_custom_call.1} parent=1 // pred_region
      %64 = dma.done [#allocation7], 1024
    $region37: #{tpu_custom_call.1} parent=1 // pred_fallthru
      _
    %p66 = scmp.eq.s32.totalorder 0, 0
    // Predicated region
    $region38: #{tpu_custom_call.1} parent=1 // pred_check
      %p67 = pneg %p66
    $region39: #{tpu_custom_call.1} parent=1 // pred_check_branch
      %69 = sbr.rel (%p67) target = $region41
    $region40: #{tpu_custom_call.1} parent=1 // pred_region
      %v70 = vld [vmem:[#allocation3] sm:$0xff]
      %v71 = vld [vmem:[#allocation3 + $0x8] sm:$0xff]
      %v72 = vmul.f32 %v70, %v70
      %v73 = vmul.f32 %v71, %v71
      %74 = vadd.xlane.f32.xlu0 %v72
      %v75 = vpop.xlane.xlu0 %74
      %76 = vadd.xlane.f32.xlu0 %v73
      %v77 = vpop.xlane.xlu0 %76
      %v78 = vmul.f32 %v75, 0.03125
      %v79 = vmul.f32 %v77, 0.03125
      %v80 = vadd.f32 %v78, 1e-06
      %v81 = vadd.f32 %v79, 1e-06
      %v82 = vrsqrt.pop %v80
      %v83 = vrsqrt.pop %v81
      %v84 = vld [vmem:[%s1] sm:$0x1]
      %v86 = vlaneseq
      %v87 = vshrl.u32 %v86, 7
      %v88 = vsub.s32 0, %v87
      %v89 = vrot.slane %v84, %v88
      %v91 = vmul.f32 %v89, %v70
      %v92 = vmul.f32 %v89, %v71
      %v93 = vmul.f32 %v91, %v82
      %v94 = vmul.f32 %v92, %v83
      %v95 = vpack.c.bf16 %v94, %v93
      %96 = vst [vmem:[#allocation2] sm:$0xff] %v95
      %97 = vst [vmem:[#allocation9] sm:$0xff] 0.0
      %98 = vst [vmem:[#allocation9 + $0x8] sm:$0xff] 0.0
    $region41: #{tpu_custom_call.1} parent=1 // pred_fallthru
      _
    %v99 = vld [vmem:[%s3] sm:$0x1]
    %v100 = vld [vmem:[#allocation2] sm:$0xff]
    %v101 = vld [vmem:[#allocation6] sm:$0xf]
    %v102 = vld [vmem:[#allocation6 + $0x4] sm:$0xf]
    %v103 = vld [vmem:[#allocation6 + $0x8] sm:$0xf]
    %v104 = vld [vmem:[#allocation6 + $0xc] sm:$0xf]
    %v105 = vld [vmem:[#allocation6 + $0x10] sm:$0xf]
    %v106 = vld [vmem:[#allocation6 + $0x14] sm:$0xf]
    %v107 = vld [vmem:[#allocation6 + $0x18] sm:$0xf]
    %v108 = vld [vmem:[#allocation6 + $0x1c] sm:$0xf]
    %v109 = vld [vmem:[#allocation6 + $0x20] sm:$0xf]
    %v110 = vld [vmem:[#allocation6 + $0x24] sm:$0xf]
    %v111 = vld [vmem:[#allocation6 + $0x28] sm:$0xf]
    %v112 = vld [vmem:[#allocation6 + $0x2c] sm:$0xf]
    %v113 = vld [vmem:[#allocation6 + $0x30] sm:$0xf]
    %v114 = vld [vmem:[#allocation6 + $0x34] sm:$0xf]
    %v115 = vld [vmem:[#allocation6 + $0x38] sm:$0xf]
    %v116 = vld [vmem:[#allocation6 + $0x3c] sm:$0xf]
    %v118 = vlaneseq
    %v119 = vshrl.u32 %v118, 7
    %v120 = vsub.s32 0, %v119
    %v121 = vrot.slane %v99, %v120
    %v139 = vunpack.c.l.b16 %v101
    %v140 = vunpack.c.l.b16 %v102
    %v141 = vunpack.c.l.b16 %v103
    %v142 = vunpack.c.l.b16 %v104
    %v143 = vunpack.c.l.b16 %v105
    %v144 = vunpack.c.l.b16 %v106
    %v145 = vunpack.c.l.b16 %v107
    %v146 = vunpack.c.l.b16 %v108
    %v147 = vunpack.c.l.b16 %v109
    %v148 = vunpack.c.l.b16 %v110
    %v149 = vunpack.c.l.b16 %v111
    %v150 = vunpack.c.l.b16 %v112
    %v151 = vunpack.c.l.b16 %v113
    %v152 = vunpack.c.l.b16 %v114
    %v153 = vunpack.c.l.b16 %v115
    %v154 = vunpack.c.l.b16 %v116
    %v155 = vpack.c.b16 %v140, %v139
    %v156 = vpack.c.b16 %v142, %v141
    %v157 = vpack.c.b16 %v144, %v143
    %v158 = vpack.c.b16 %v146, %v145
    %v159 = vpack.c.b16 %v148, %v147
    %v160 = vpack.c.b16 %v150, %v149
    %v161 = vpack.c.b16 %v152, %v151
    %v162 = vpack.c.b16 %v154, %v153
    %171 = vmatprep.subr.bf16.mxu0 0
    %172 = vmatpush1.bf16.msra.mxu0 %v155
    %173 = vmatprep.subr.bf16.mxu0 0
    %174 = vmatpush1.bf16.msra.mxu0 %v156
    %175 = vmatprep.subr.bf16.mxu0 0
    %176 = vmatpush1.bf16.msra.mxu0 %v157
    %177 = vmatprep.subr.bf16.mxu0 0
    %178 = vmatpush1.bf16.msra.mxu0 %v158
    %179 = vmatprep.subr.bf16.mxu0 0
    %180 = vmatpush1.bf16.msra.mxu0 %v159
    %181 = vmatprep.subr.bf16.mxu0 0
    %182 = vmatpush1.bf16.msra.mxu0 %v160
    %183 = vmatprep.subr.bf16.mxu0 0
    %184 = vmatpush1.bf16.msra.mxu0 %v161
    %185 = vmatprep.subr.bf16.mxu0 0
    %186 = vmatpush1.bf16.msra.mxu0 %v162
    %187 = vmatprep.subr.bf16.mxu0 0
    %188 = vmatpush1.bf16.msra.mxu0 0
    %189 = vmatprep.subr.bf16.mxu0 0
    %190 = vmatpush1.bf16.msra.mxu0 0
    %191 = vmatprep.subr.bf16.mxu0 0
    %192 = vmatpush1.bf16.msra.mxu0 0
    %193 = vmatprep.subr.bf16.mxu0 0
    %194 = vmatpush1.bf16.msra.mxu0 0
    %195 = vmatprep.subr.bf16.mxu0 0
    %196 = vmatpush1.bf16.msra.mxu0 0
    %197 = vmatprep.subr.bf16.mxu0 0
    %198 = vmatpush1.bf16.msra.mxu0 0
    %199 = vmatprep.subr.bf16.mxu0 0
    %200 = vmatpush1.bf16.msra.mxu0 0
    %201 = vmatprep.subr.bf16.mxu0 0
    %202 = vmatpush1.bf16.msra.mxu0 0
    %203 = vmatprep.mubr.bf16.mxu0 0
    %204 = vmatmul.mubr.bf16.gmra.mrb[0].mxu0 %v100
    %v205 = vpop.f32.mrb[0].mxu0
    %v206 = vadd.f32 %v121, %v205
    %v207 = vpop.f32.mrb[0].mxu0
    %v208 = vpop.f32.mrb[0].mxu0
    %v209 = vadd.f32 %v121, %v208
    %v210 = vpop.f32.mrb[0].mxu0
    %211 = vdwg.mxu0
    %v212 = vmul.f32 %v206, 0.5
    %v213 = vmul.f32 %v209, 0.5
    %v214 = vmul.f32 %v206, 0.70710677
    %v215 = vmul.f32 %v209, 0.70710677
    %v216 = verf.f32.pop %v214
    %v217 = verf.f32.pop %v215
    %v218 = vadd.f32 %v216, 1.0
    %v219 = vadd.f32 %v217, 1.0
    %v220 = vmul.f32 %v212, %v218
    %v221 = vmul.f32 %v213, %v219
    %v222 = vld [vmem:[#allocation9] sm:$0xff]
    %v223 = vld [vmem:[#allocation9 + $0x8] sm:$0xff]
    %v224 = vpack.c.bf16 %v221, %v220
    %v225 = vld [vmem:[#allocation8] sm:$0xf]
    %v226 = vld [vmem:[#allocation8 + $0x4] sm:$0xf]
    %v227 = vld [vmem:[#allocation8 + $0x8] sm:$0xf]
    %v228 = vld [vmem:[#allocation8 + $0xc] sm:$0xf]
    %v229 = vld [vmem:[#allocation8 + $0x10] sm:$0xf]
    %v230 = vld [vmem:[#allocation8 + $0x14] sm:$0xf]
    %v231 = vld [vmem:[#allocation8 + $0x18] sm:$0xf]
    %v232 = vld [vmem:[#allocation8 + $0x1c] sm:$0xf]
    %v233 = vld [vmem:[#allocation8 + $0x20] sm:$0xf]
    %v234 = vld [vmem:[#allocation8 + $0x24] sm:$0xf]
    %v235 = vld [vmem:[#allocation8 + $0x28] sm:$0xf]
    %v236 = vld [vmem:[#allocation8 + $0x2c] sm:$0xf]
    %v237 = vld [vmem:[#allocation8 + $0x30] sm:$0xf]
    %v238 = vld [vmem:[#allocation8 + $0x34] sm:$0xf]
    %v239 = vld [vmem:[#allocation8 + $0x38] sm:$0xf]
    %v240 = vld [vmem:[#allocation8 + $0x3c] sm:$0xf]
    %v257 = vunpack.c.l.b16 %v225
    %v258 = vunpack.c.l.b16 %v226
    %v259 = vunpack.c.l.b16 %v227
    %v260 = vunpack.c.l.b16 %v228
    %v261 = vunpack.c.l.b16 %v229
    %v262 = vunpack.c.l.b16 %v230
    %v263 = vunpack.c.l.b16 %v231
    %v264 = vunpack.c.l.b16 %v232
    %v265 = vunpack.c.l.b16 %v233
    %v266 = vunpack.c.l.b16 %v234
    %v267 = vunpack.c.l.b16 %v235
    %v268 = vunpack.c.l.b16 %v236
    %v269 = vunpack.c.l.b16 %v237
    %v270 = vunpack.c.l.b16 %v238
    %v271 = vunpack.c.l.b16 %v239
    %v272 = vunpack.c.l.b16 %v240
    %v273 = vpack.c.b16 %v258, %v257
    %v274 = vpack.c.b16 %v260, %v259
    %v275 = vpack.c.b16 %v262, %v261
    %v276 = vpack.c.b16 %v264, %v263
    %v277 = vpack.c.b16 %v266, %v265
    %v278 = vpack.c.b16 %v268, %v267
    %v279 = vpack.c.b16 %v270, %v269
    %v280 = vpack.c.b16 %v272, %v271
    %289 = vmatprep.subr.bf16.mxu0 0
    %290 = vmatpush1.bf16.msra.mxu0 %v273
    %291 = vmatprep.subr.bf16.mxu0 0
    %292 = vmatpush1.bf16.msra.mxu0 %v274
    %293 = vmatprep.subr.bf16.mxu0 0
    %294 = vmatpush1.bf16.msra.mxu0 %v275
    %295 = vmatprep.subr.bf16.mxu0 0
    %296 = vmatpush1.bf16.msra.mxu0 %v276
    %297 = vmatprep.subr.bf16.mxu0 0
    %298 = vmatpush1.bf16.msra.mxu0 %v277
    %299 = vmatprep.subr.bf16.mxu0 0
    %300 = vmatpush1.bf16.msra.mxu0 %v278
    %301 = vmatprep.subr.bf16.mxu0 0
    %302 = vmatpush1.bf16.msra.mxu0 %v279
    %303 = vmatprep.subr.bf16.mxu0 0
    %304 = vmatpush1.bf16.msra.mxu0 %v280
    %305 = vmatprep.subr.bf16.mxu0 0
    %306 = vmatpush1.bf16.msra.mxu0 0
    %307 = vmatprep.subr.bf16.mxu0 0
    %308 = vmatpush1.bf16.msra.mxu0 0
    %309 = vmatprep.subr.bf16.mxu0 0
    %310 = vmatpush1.bf16.msra.mxu0 0
    %311 = vmatprep.subr.bf16.mxu0 0
    %312 = vmatpush1.bf16.msra.mxu0 0
    %313 = vmatprep.subr.bf16.mxu0 0
    %314 = vmatpush1.bf16.msra.mxu0 0
    %315 = vmatprep.subr.bf16.mxu0 0
    %316 = vmatpush1.bf16.msra.mxu0 0
    %317 = vmatprep.subr.bf16.mxu0 0
    %318 = vmatpush1.bf16.msra.mxu0 0
    %319 = vmatprep.subr.bf16.mxu0 0
    %320 = vmatpush1.bf16.msra.mxu0 0
    %321 = vmatprep.mubr.bf16.mxu0 0
    %322 = vmatmul.mubr.bf16.gmra.mrb[0].mxu0 %v224
    %v323 = vpop.f32.mrb[0].mxu0
    %v324 = vadd.f32 0.0, %v323
    %v325 = vpop.f32.mrb[0].mxu0
    %v326 = vpop.f32.mrb[0].mxu0
    %v327 = vadd.f32 0.0, %v326
    %v328 = vpop.f32.mrb[0].mxu0
    %329 = vdwg.mxu0
    %v330 = vadd.f32 %v222, %v324
    %v331 = vadd.f32 %v223, %v327
    %332 = vst [vmem:[#allocation9] sm:$0xff] %v330
    %333 = vst [vmem:[#allocation9 + $0x8] sm:$0xff] %v331
    // Predicated region
    $region42: #{tpu_custom_call.1} parent=1 // pred_check
      %p334 = pneg %p66
    $region43: #{tpu_custom_call.1} parent=1 // pred_check_branch
      %336 = sbr.rel (%p334) target = $region45
    $region44: #{tpu_custom_call.1} parent=1 // pred_region
      %v337 = vld [vmem:[#allocation9] sm:$0xff]
      %v338 = vld [vmem:[#allocation9 + $0x8] sm:$0xff]
      %v339 = vld [vmem:[%s5] sm:$0x1]
      %v341 = vlaneseq
      %v342 = vshrl.u32 %v341, 7
      %v343 = vsub.s32 0, %v342
      %v344 = vrot.slane %v339, %v343
      %v346 = vadd.f32 %v337, %v344
      %v347 = vadd.f32 %v338, %v344
      %348 = vst [vmem:[#allocation9] sm:$0xff] %v346
      %349 = vst [vmem:[#allocation9 + $0x8] sm:$0xff] %v347
    $region45: #{tpu_custom_call.1} parent=1 // pred_fallthru
      _
    // Predicated region
    $region46: #{tpu_custom_call.1} parent=1 // pred_check
      _
    $region47: #{tpu_custom_call.1} parent=1 // pred_check_branch
      %351 = sbr.rel (0) target = $region49
    $region48: #{tpu_custom_call.1} parent=1 // pred_region
      %s353 = ssub.s32 256, 256
      %354 = vsyncadd [#allocation5], %s353
      %s355 = sshll.u32 [#allocation9], 4
      %s356 = int_to_ptr.vmem [resolvable:$true] %s355
      %361 = dma.vmem_to_hbm [thread:$0]  %s356, 256, %s6, [#allocation5], 128, 128, 8
    $region49: #{tpu_custom_call.1} parent=1 // pred_fallthru
      _
    // Predicated region
    $region50: #{tpu_custom_call.1} parent=1 // pred_check
      _
    $region51: #{tpu_custom_call.1} parent=1 // pred_check_branch
      %363 = sbr.rel (0) target = $region53
    $region52: #{tpu_custom_call.1} parent=1 // pred_region
      %364 = dma.done [#allocation5], 256
    $region53: #{tpu_custom_call.1} parent=1 // pred_fallthru
      _
    %365 = vsyncpa [#allocation4], 1
    %366 = vsyncpa [#allocation7], 1
    %367 = vsyncpa [#allocation5], 1

</llo_original>
